<compile_context>
chip_gen: v5e
topology: v5e:2x2
jax: 0.10.0
libtpu: 0.0.40
codegen_flags: <defaults>
</compile_context>

<pallas_src>
import functools

import numpy as np
import jax
import jax.numpy as jnp
from jax.experimental import pallas as pl
from jax.experimental.pallas import tpu as pltpu

# Module hyper-parameters (n_heads must be 8 to match the hard-coded grid_init of the spec).
D_MODEL = 32
N_HEADS = 8
N_LEVELS = 2
N_POINTS = 2
HEAD_DIM = D_MODEL // N_HEADS

# TODO(synk): re-derive VMEM budget / tile sizes per generation (v5e/v6e: 128 MiB physical,
# v7x: 64 MiB) instead of one constant; 32 MiB scoped is safe everywhere at these shapes.
VMEM_LIMIT = 32 * 1024 * 1024


# --------------- fused sampling-offset / attention-weight projection ---------------

def _qproj_kernel(q_ref, w_ref, b_ref, off_ref, attn_ref, *, off_dim, n_heads, lp):
    y = jnp.dot(q_ref[...], w_ref[...], preferred_element_type=jnp.float32) + b_ref[...]
    off_ref[...] = y[:, :off_dim].astype(off_ref.dtype)
    aw = y[:, off_dim:]
    # per-head softmax over the (n_levels * n_points) lane group, done in-kernel.
    # TODO(synk): replace the slice loop with a lane-local segmented reduce (pltpu.roll under a
    # group mask) if profiling shows it in the XLU/ld-st slots at production Lq.
    groups = []
    for h in range(n_heads):
        g = aw[:, h * lp:(h + 1) * lp]
        m = jnp.max(g, axis=-1, keepdims=True)
        e = jnp.exp(g - m)
        groups.append(e / jnp.sum(e, axis=-1, keepdims=True))
    attn_ref[...] = jnp.concatenate(groups, axis=-1).astype(attn_ref.dtype)


def pallas_query_proj(q2d, w_off, b_off, w_attn, b_attn, block_m=512):
    """One pallas_call: [sampling_offsets | attention_weights] matmul + per-head softmax."""
    M, C = q2d.shape
    off_dim = w_off.shape[1]
    aw_dim = w_attn.shape[1]
    lp = N_LEVELS * N_POINTS
    w = jnp.concatenate([w_off, w_attn], axis=1)
    b = jnp.concatenate([b_off, b_attn]).reshape(1, -1)
    # No pad/slice HBM copies: either one full-extent block (M <= block_m) or a multiple-of-8 row
    # tile with the ragged last block handled by Pallas (OOB reads unspecified, OOB writes dropped).
    bm = M if M <= block_m else block_m
    kernel = functools.partial(_qproj_kernel, off_dim=off_dim, n_heads=N_HEADS, lp=lp)
    off, attn = pl.pallas_call(
        kernel,
        out_shape=(jax.ShapeDtypeStruct((M, off_dim), jnp.float32),
                   jax.ShapeDtypeStruct((M, aw_dim), jnp.float32)),
        grid=(pl.cdiv(M, bm),),
        in_specs=[pl.BlockSpec((bm, C), lambda i: (i, 0)),
                  pl.BlockSpec((C, off_dim + aw_dim), lambda i: (0, 0)),
                  pl.BlockSpec((1, off_dim + aw_dim), lambda i: (0, 0))],
        out_specs=(pl.BlockSpec((bm, off_dim), lambda i: (i, 0)),
                   pl.BlockSpec((bm, aw_dim), lambda i: (i, 0))),
        compiler_params=pltpu.CompilerParams(
            dimension_semantics=("parallel",),
            vmem_limit_bytes=VMEM_LIMIT),
    )(q2d, w, b)
    return off, attn


# ----------------------------- deformable attention core -----------------------------

def _deform_core_kernel(*refs, spatial_shapes, n_heads, n_points, len_q, has_mask, plane_dtype):
    # packed : (P*H*Lq, 3*L) f32, rows ordered (point, head, query), cols = [x_l, y_l, a_l] per level
    # x      : (Len_in, C)   f32, raw input_flatten slab (value_proj fused below)
    # keep   : (Len_in, 1)   f32 optional padding keep-mask (1 = valid)
    # centers: (2, Len_in)   f32, row 0 = col+0.5, row 1 = row+0.5 per flattened spatial position
    # wv/bv  : value_proj, wo/bo: output_proj
    # o      : (Lq, C) f32 lane-dense output block
    if has_mask:
        packed_ref, x_ref, keep_ref, centers_ref, wv_ref, bv_ref, wo_ref, bo_ref, o_ref = refs
    else:
        packed_ref, x_ref, centers_ref, wv_ref, bv_ref, wo_ref, bo_ref, o_ref = refs
        keep_ref = None

    H, P, Lq = n_heads, n_points, len_q
    C = x_ref.shape[-1]
    D = C // H
    HQ = H * Lq

    # value projection fused on the MXU (no HBM round trip of the (N, Len_in, C) value tensor)
    val = jnp.dot(x_ref[...], wv_ref[...], preferred_element_type=jnp.float32) + bv_ref[...]
    if keep_ref is not None:
        val = val * keep_ref[...]            # masked_fill(pad, 0) applied post-projection
    val = val.astype(jnp.bfloat16)           # MXU-native operand for the sampling matmuls

    acc = jnp.zeros((P * HQ, C), jnp.float32)    # single accumulator across levels
    start = 0
    for l, (Hl, Wl) in enumerate(spatial_shapes):
        Sl = Hl * Wl
        val_l = val[start:start + Sl, :]                      # (Sl, C) bf16
        colp = centers_ref[0:1, start:start + Sl]             # (1, Sl) pixel-center cols (c + 0.5)
        rowp = centers_ref[1:2, start:start + Sl]             # (1, Sl) pixel-center rows (r + 0.5)
        start += Sl
        # this level's sampling locations / attention weight, as (P*H*Lq, 1) columns
        x = packed_ref[:, 3 * l + 0:3 * l + 1] * float(Wl)
        y = packed_ref[:, 3 * l + 1:3 * l + 2] * float(Hl)
        a = packed_ref[:, 3 * l + 2:3 * l + 3]
        # zero-padded bilinear sampling as a triangle-kernel weight plane -> one MXU matmul.
        # Differences in f32 (keeps the fractional weight exact), triangle + product in
        # plane_dtype (bf16 on v6e/v7x halves the binding VALU work; use f32 on v5e).
        cd = (colp - x).astype(plane_dtype)                   # (P*H*Lq, Sl)
        rd = (rowp - y).astype(plane_dtype)
        plane = (jnp.maximum(0.0, 1.0 - jnp.abs(cd))
                 * jnp.maximum(0.0, 1.0 - jnp.abs(rd))).astype(jnp.bfloat16)
        # NOTE: only C=32 MXU output columns are driven and K=Sl may be < 128/256; harmless here
        # (the kernel is VALU-bound at D_MODEL=32) — see production-shape TODO in the wrapper.
        smp = jnp.dot(plane, val_l, preferred_element_type=jnp.float32)   # (P*H*Lq, C) f32
        acc = acc + smp * a                                   # attention applied off the plane

    # point-axis reduction: rows ordered (point, head, query) -> contiguous sublane-block adds
    red = acc[0:HQ, :]
    for p in range(1, P):
        red = red + acc[p * HQ:(p + 1) * HQ, :]
    # per-head channel extraction done once, as a lane-mask select (stays lane-dense)
    col_head = jax.lax.broadcasted_iota(jnp.int32, (1, C), 1) // D
    core = jnp.zeros((Lq, C), jnp.float32)
    for h in range(H):
        core = core + jnp.where(col_head == h, red[h * Lq:(h + 1) * Lq, :], 0.0)
    # fused output projection, lane-dense (Lq, C) store
    o_ref[...] = (jnp.dot(core, wo_ref[...], preferred_element_type=jnp.float32)
                  + bo_ref[...]).astype(o_ref.dtype)


def deform_attn_core(input_flatten, loc, attn, spatial_shapes, w_val, b_val, w_out, b_out,
                     input_padding_mask=None, plane_dtype=jnp.bfloat16):
    """input_flatten: (N, Len_in, C) raw features (value_proj fused in-kernel);
       loc: (N, Lq, H, L, P, 2); attn: (N, Lq, H, L, P)."""
    N, Len_in, C = input_flatten.shape
    _, Lq, H, L, P, _ = loc.shape
    HQP = P * H * Lq

    # Pack sampling x/y and attention weight into one lane-friendly stream per batch.
    # Rows ordered (point, head, query) so the in-kernel point reduction is a contiguous add;
    # last dim = [x_l, y_l, a_l] per level.
    loc_t = jnp.transpose(loc, (0, 4, 2, 1, 3, 5))               # (N, P, H, Lq, L, 2)
    attn_t = jnp.transpose(attn, (0, 4, 2, 1, 3))[..., None]     # (N, P, H, Lq, L, 1)
    packed = jnp.concatenate([loc_t, attn_t], axis=-1).reshape(N, HQP, 3 * L)

    # Grid-invariant pixel centers (col+0.5 / row+0.5 per flattened spatial position), precomputed
    # host-side once (folds grid_sample's -0.5) instead of per-grid-step iota + divide + floor.
    cols, rows = [], []
    for (Hl, Wl) in spatial_shapes:
        cols.append(np.tile(np.arange(Wl, dtype=np.float32), Hl) + 0.5)
        rows.append(np.repeat(np.arange(Hl, dtype=np.float32), Wl) + 0.5)
    centers = jnp.asarray(np.stack([np.concatenate(cols), np.concatenate(rows)], axis=0))

    has_mask = input_padding_mask is not None
    kernel = functools.partial(
        _deform_core_kernel,
        spatial_shapes=tuple(tuple(int(v) for v in s) for s in spatial_shapes),
        n_heads=H, n_points=P, len_q=Lq, has_mask=has_mask, plane_dtype=plane_dtype)

    in_specs = [pl.BlockSpec((None, HQP, 3 * L), lambda n: (n, 0, 0)),   # packed loc/attn stream
                pl.BlockSpec((None, Len_in, C), lambda n: (n, 0, 0))]    # raw input_flatten slab
    args = [packed, input_flatten]
    if has_mask:
        keep = 1.0 - input_padding_mask.astype(jnp.float32)[..., None]  # (N, Len_in, 1)
        in_specs.append(pl.BlockSpec((None, Len_in, 1), lambda n: (n, 0, 0)))
        args.append(keep)
    in_specs += [pl.BlockSpec((2, Len_in), lambda n: (0, 0)),            # pixel centers
                 pl.BlockSpec((C, C), lambda n: (0, 0)),                 # value_proj weight
                 pl.BlockSpec((1, C), lambda n: (0, 0)),                 # value_proj bias
                 pl.BlockSpec((C, C), lambda n: (0, 0)),                 # output_proj weight
                 pl.BlockSpec((1, C), lambda n: (0, 0))]                 # output_proj bias
    args += [centers, w_val, b_val.reshape(1, C), w_out, b_out.reshape(1, C)]

    # TODO(synk): at production DETR shapes (Lq~300, Sl~15k) add (a) a query-tile grid axis and
    # (b) an Sl-chunked contraction (accumulate the (rows, C) matmul per chunk) so the plane plus
    # double-buffered blocks fit v7x's 64 MiB VMEM, and so N=1 inference still exposes >=2
    # parallel grid steps for v7x's two TensorCores; unnecessary at these toy shapes.
    out = pl.pallas_call(
        kernel,
        out_shape=jax.ShapeDtypeStruct((N, Lq, C), jnp.float32),
        grid=(N,),
        in_specs=in_specs,
        out_specs=pl.BlockSpec((None, Lq, C), lambda n: (n, 0, 0)),
        compiler_params=pltpu.CompilerParams(
            dimension_semantics=("parallel",),
            vmem_limit_bytes=VMEM_LIMIT),
    )(*args)
    return out   # (N, Lq, C): value_proj, sampling, and output_proj all applied in-kernel


# ----------------------------- Module forward -----------------------------

def init_params(key):
    """Deterministic init, mirroring MSDeformAttn._reset_parameters (weights stored as (in, out))."""
    C, H, L, P = D_MODEL, N_HEADS, N_LEVELS, N_POINTS
    k1, k2 = jax.random.split(key)
    a = float(np.sqrt(6.0 / (C + C)))                       # xavier_uniform bound
    grid = np.array([-1, -1, -1, 0, -1, 1, 0, -1, 0, 1, 1, -1, 1, 0, 1, 1],
                    np.float32).reshape(H, 1, 1, 2)
    grid = np.tile(grid, (1, L, P, 1)) * np.arange(1, P + 1, dtype=np.float32).reshape(1, 1, P, 1)
    return {
        'value_proj_w': jax.random.uniform(k1, (C, C), jnp.float32, -a, a),
        'value_proj_b': jnp.zeros((C,), jnp.float32),
        'samp_off_w': jnp.zeros((C, H * L * P * 2), jnp.float32),
        'samp_off_b': jnp.asarray(grid.reshape(-1)),
        'attn_w_w': jnp.zeros((C, H * L * P), jnp.float32),
        'attn_w_b': jnp.zeros((H * L * P,), jnp.float32),
        'out_proj_w': jax.random.uniform(k2, (C, C), jnp.float32, -a, a),
        'out_proj_b': jnp.zeros((C,), jnp.float32),
    }


def ms_deform_attn_forward(params, query, reference_points, input_flatten,
                           spatial_shapes, input_padding_mask=None, query_attn_mask=None):
    N, Lq, C = query.shape
    _, Len_in, _ = input_flatten.shape
    H, L, P = N_HEADS, N_LEVELS, N_POINTS
    assert sum(h * w for h, w in spatial_shapes) == Len_in

    # fused sampling-offset + attention-weight projection (+ per-head softmax), one pallas_call
    off2d, aw2d = pallas_query_proj(query.reshape(N * Lq, C),
                                    params['samp_off_w'], params['samp_off_b'],
                                    params['attn_w_w'], params['attn_w_b'])
    off = off2d.reshape(N, Lq, H, L, P, 2)
    aw = aw2d.reshape(N, Lq, H, L, P)
    if query_attn_mask is not None:
        aw = jnp.where(query_attn_mask[:, :, None, None, None], 0.0, aw)

    # sampling locations (tiny elementwise glue, exactly as written in the spec module)
    ss = jnp.asarray(spatial_shapes, jnp.float32)            # (L, 2) rows = (H_l, W_l)
    if reference_points.shape[-1] == 2:
        loc = reference_points[:, :, None, :, None, :] + off / ss[None, None, None, :, None, :]
    elif reference_points.shape[-1] == 4:
        loc = (reference_points[:, :, None, :, None, :2]
               + off / P * reference_points[:, :, None, :, None, 2:] * 0.5)
    else:
        raise ValueError('Last dim of reference_points must be 2 or 4.')

    # deformable attention core: value_proj + padding mask + bilinear-sampling-as-matmul +
    # output projection all in one kernel, grid over batch.
    return deform_attn_core(input_flatten, loc, aw, spatial_shapes,
                            params['value_proj_w'], params['value_proj_b'],
                            params['out_proj_w'], params['out_proj_b'],
                            input_padding_mask=input_padding_mask)


# ------------------ Pure-JAX reference (gather-based grid_sample) ------------------

def reference_forward(params, query, reference_points, input_flatten, spatial_shapes,
                      input_padding_mask=None, query_attn_mask=None):
    N, Lq, C = query.shape
    _, Len_in, _ = input_flatten.shape
    H, L, P, D = N_HEADS, N_LEVELS, N_POINTS, HEAD_DIM
    value = input_flatten @ params['value_proj_w'] + params['value_proj_b']
    if input_padding_mask is not None:
        value = jnp.where(input_padding_mask[..., None], 0.0, value)
    value = value.reshape(N, Len_in, H, D)
    off = (query @ params['samp_off_w'] + params['samp_off_b']).reshape(N, Lq, H, L, P, 2)
    aw = (query @ params['attn_w_w'] + params['attn_w_b']).reshape(N, Lq, H, L * P)
    aw = jax.nn.softmax(aw, axis=-1).reshape(N, Lq, H, L, P)
    if query_attn_mask is not None:
        aw = jnp.where(query_attn_mask[:, :, None, None, None], 0.0, aw)
    ss = jnp.asarray(spatial_shapes, jnp.float32)
    if reference_points.shape[-1] == 2:
        loc = reference_points[:, :, None, :, None, :] + off / ss[None, None, None, :, None, :]
    else:
        loc = (reference_points[:, :, None, :, None, :2]
               + off / P * reference_points[:, :, None, :, None, 2:] * 0.5)

    out_heads = jnp.zeros((N, Lq, H, D), jnp.float32)
    bidx = jnp.arange(N).reshape(N, 1, 1, 1)
    hidx = jnp.arange(H).reshape(1, 1, H, 1)
    start = 0
    for lid, (Hl, Wl) in enumerate(spatial_shapes):
        v_l = value[:, start:start + Hl * Wl].reshape(N, Hl, Wl, H, D)
        start += Hl * Wl
        x = loc[:, :, :, lid, :, 0] * Wl - 0.5      # (N, Lq, H, P)
        y = loc[:, :, :, lid, :, 1] * Hl - 0.5
        x0 = jnp.floor(x); y0 = jnp.floor(y)
        x0i = x0.astype(jnp.int32); y0i = y0.astype(jnp.int32)

        def gather(yy, xx):
            valid = ((yy >= 0) & (yy < Hl) & (xx >= 0) & (xx < Wl)).astype(jnp.float32)
            yc = jnp.clip(yy, 0, Hl - 1); xc = jnp.clip(xx, 0, Wl - 1)
            return v_l[bidx, yc, xc, hidx] * valid[..., None]      # (N, Lq, H, P, D)

        wx1 = x - x0; wx0 = 1.0 - wx1
        wy1 = y - y0; wy0 = 1.0 - wy1
        samp = (gather(y0i, x0i) * (wy0 * wx0)[..., None]
                + gather(y0i, x0i + 1) * (wy0 * wx1)[..., None]
                + gather(y0i + 1, x0i) * (wy1 * wx0)[..., None]
                + gather(y0i + 1, x0i + 1) * (wy1 * wx1)[..., None])
        out_heads = out_heads + (samp * aw[:, :, :, lid, :, None]).sum(axis=3)
    out = out_heads.reshape(N, Lq, C)
    return out @ params['out_proj_w'] + params['out_proj_b']


# ----------------------------- Main -----------------------------

if __name__ == "__main__":
    N, Lq = 2, 8
    spatial_shapes = ((8, 8), (4, 4))          # n_levels = 2
    Len_in = sum(h * w for h, w in spatial_shapes)

    key = jax.random.PRNGKey(0)
    kq, kin, kref = jax.random.split(key, 3)
    query = jax.random.normal(kq, (N, Lq, D_MODEL), jnp.float32)
    input_flatten = jax.random.normal(kin, (N, Len_in, D_MODEL), jnp.float32)
    reference_points = jax.random.uniform(kref, (N, Lq, N_LEVELS, 2), dtype=jnp.float32)

    params = init_params(jax.random.PRNGKey(42))

    out = ms_deform_attn_forward(params, query, reference_points, input_flatten, spatial_shapes)
    out = jax.block_until_ready(out)
    assert out.shape == (N, Lq, D_MODEL)

    ref = reference_forward(params, query, reference_points, input_flatten, spatial_shapes)
    # bf16 interpolation weights + bf16 value on the MXU vs the full-f32 reference
    # (documented precision trade; pass plane_dtype=jnp.float32 for tighter accuracy / on v5e).
    np.testing.assert_allclose(np.asarray(out), np.asarray(ref), rtol=4e-2, atol=4e-2)
    print("KERNEL_OK")
</pallas_src>

<mosaic_0001>
module attributes {stable_mosaic.version = 11 : i64} {
  func.func @_qproj_kernel(%arg0: i32, %arg1: memref<16x32xf32, #tpu.memory_space<vmem>>, %arg2: memref<32x96xf32, #tpu.memory_space<vmem>>, %arg3: memref<1x96xf32, #tpu.memory_space<vmem>>, %arg4: memref<16x64xf32, #tpu.memory_space<vmem>>, %arg5: memref<16x32xf32, #tpu.memory_space<vmem>>) attributes {dimension_semantics = [#tpu.dimension_semantics<parallel>], iteration_bounds = array<i64: 1>, scalar_prefetch = 0 : i64, scratch_operands = 0 : i64, tpu.core_type = #tpu.core_type<tc>, window_params = [{transform_indices = @transform_0, window_bounds = array<i64: 16, 32>}, {pipeline_mode = #tpu.pipeline_mode<synchronous>, transform_indices = @transform_1, window_bounds = array<i64: 32, 96>}, {pipeline_mode = #tpu.pipeline_mode<synchronous>, transform_indices = @transform_2, window_bounds = array<i64: 1, 96>}, {transform_indices = @transform_3, window_bounds = array<i64: 16, 64>}, {transform_indices = @transform_4, window_bounds = array<i64: 16, 32>}]} {
    %c0 = arith.constant 0 : index
    %c0_0 = arith.constant 0 : index
    %0 = vector.load %arg1[%c0, %c0_0] : memref<16x32xf32, #tpu.memory_space<vmem>>, vector<16x32xf32>
    %c0_1 = arith.constant 0 : index
    %c0_2 = arith.constant 0 : index
    %1 = vector.load %arg2[%c0_1, %c0_2] : memref<32x96xf32, #tpu.memory_space<vmem>>, vector<32x96xf32>
    %cst = arith.constant dense<0.000000e+00> : vector<16x96xf32>
    %2 = tpu.matmul %0, %1, %cst {dimension_numbers = #tpu.dot_dimension_numbers<[1], [0], [0], [1], [0, 0, 1, 1], [], []>} : vector<16x32xf32>, vector<32x96xf32>, vector<16x96xf32> -> vector<16x96xf32>
    %c0_3 = arith.constant 0 : index
    %c0_4 = arith.constant 0 : index
    %3 = vector.load %arg3[%c0_3, %c0_4] : memref<1x96xf32, #tpu.memory_space<vmem>>, vector<1x96xf32>
    %4 = vector.broadcast %3 : vector<1x96xf32> to vector<16x96xf32>
    %5 = arith.addf %2, %4 : vector<16x96xf32>
    %6 = vector.extract_strided_slice %5 {offsets = [0, 0], sizes = [16, 64], strides = [1, 1]} : vector<16x96xf32> to vector<16x64xf32>
    %c0_5 = arith.constant 0 : index
    %c0_6 = arith.constant 0 : index
    %7 = vector.load %arg4[%c0_5, %c0_6] : memref<16x64xf32, #tpu.memory_space<vmem>>, vector<16x64xf32>
    tpu.vector_store %arg4[%c0_5, %c0_6], %6 {strides = array<i32>} : memref<16x64xf32, #tpu.memory_space<vmem>>, vector<16x64xf32>,
    %8 = vector.extract_strided_slice %5 {offsets = [0, 64], sizes = [16, 32], strides = [1, 1]} : vector<16x96xf32> to vector<16x32xf32>
    %9 = vector.extract_strided_slice %8 {offsets = [0, 0], sizes = [16, 4], strides = [1, 1]} : vector<16x32xf32> to vector<16x4xf32>
    %cst_7 = arith.constant dense<0xFF800000> : vector<16xf32>
    %10 = vector.multi_reduction <maximumf>, %9, %cst_7 [1] : vector<16x4xf32> to vector<16xf32>
    %11 = vector.shape_cast %10 : vector<16xf32> to vector<16x1xf32>
    %12 = vector.broadcast %11 : vector<16x1xf32> to vector<16x4xf32>
    %13 = arith.subf %9, %12 : vector<16x4xf32>
    %14 = math.exp %13 : vector<16x4xf32>
    %cst_8 = arith.constant dense<0.000000e+00> : vector<16xf32>
    %15 = vector.multi_reduction <add>, %14, %cst_8 [1] : vector<16x4xf32> to vector<16xf32>
    %16 = vector.shape_cast %15 : vector<16xf32> to vector<16x1xf32>
    %17 = vector.broadcast %16 : vector<16x1xf32> to vector<16x4xf32>
    %18 = arith.divf %14, %17 : vector<16x4xf32>
    %19 = vector.extract_strided_slice %8 {offsets = [0, 4], sizes = [16, 4], strides = [1, 1]} : vector<16x32xf32> to vector<16x4xf32>
    %cst_9 = arith.constant dense<0xFF800000> : vector<16xf32>
    %20 = vector.multi_reduction <maximumf>, %19, %cst_9 [1] : vector<16x4xf32> to vector<16xf32>
    %21 = vector.shape_cast %20 : vector<16xf32> to vector<16x1xf32>
    %22 = vector.broadcast %21 : vector<16x1xf32> to vector<16x4xf32>
    %23 = arith.subf %19, %22 : vector<16x4xf32>
    %24 = math.exp %23 : vector<16x4xf32>
    %cst_10 = arith.constant dense<0.000000e+00> : vector<16xf32>
    %25 = vector.multi_reduction <add>, %24, %cst_10 [1] : vector<16x4xf32> to vector<16xf32>
    %26 = vector.shape_cast %25 : vector<16xf32> to vector<16x1xf32>
    %27 = vector.broadcast %26 : vector<16x1xf32> to vector<16x4xf32>
    %28 = arith.divf %24, %27 : vector<16x4xf32>
    %29 = vector.extract_strided_slice %8 {offsets = [0, 8], sizes = [16, 4], strides = [1, 1]} : vector<16x32xf32> to vector<16x4xf32>
    %cst_11 = arith.constant dense<0xFF800000> : vector<16xf32>
    %30 = vector.multi_reduction <maximumf>, %29, %cst_11 [1] : vector<16x4xf32> to vector<16xf32>
    %31 = vector.shape_cast %30 : vector<16xf32> to vector<16x1xf32>
    %32 = vector.broadcast %31 : vector<16x1xf32> to vector<16x4xf32>
    %33 = arith.subf %29, %32 : vector<16x4xf32>
    %34 = math.exp %33 : vector<16x4xf32>
    %cst_12 = arith.constant dense<0.000000e+00> : vector<16xf32>
    %35 = vector.multi_reduction <add>, %34, %cst_12 [1] : vector<16x4xf32> to vector<16xf32>
    %36 = vector.shape_cast %35 : vector<16xf32> to vector<16x1xf32>
    %37 = vector.broadcast %36 : vector<16x1xf32> to vector<16x4xf32>
    %38 = arith.divf %34, %37 : vector<16x4xf32>
    %39 = vector.extract_strided_slice %8 {offsets = [0, 12], sizes = [16, 4], strides = [1, 1]} : vector<16x32xf32> to vector<16x4xf32>
    %cst_13 = arith.constant dense<0xFF800000> : vector<16xf32>
    %40 = vector.multi_reduction <maximumf>, %39, %cst_13 [1] : vector<16x4xf32> to vector<16xf32>
    %41 = vector.shape_cast %40 : vector<16xf32> to vector<16x1xf32>
    %42 = vector.broadcast %41 : vector<16x1xf32> to vector<16x4xf32>
    %43 = arith.subf %39, %42 : vector<16x4xf32>
    %44 = math.exp %43 : vector<16x4xf32>
    %cst_14 = arith.constant dense<0.000000e+00> : vector<16xf32>
    %45 = vector.multi_reduction <add>, %44, %cst_14 [1] : vector<16x4xf32> to vector<16xf32>
    %46 = vector.shape_cast %45 : vector<16xf32> to vector<16x1xf32>
    %47 = vector.broadcast %46 : vector<16x1xf32> to vector<16x4xf32>
    %48 = arith.divf %44, %47 : vector<16x4xf32>
    %49 = vector.extract_strided_slice %8 {offsets = [0, 16], sizes = [16, 4], strides = [1, 1]} : vector<16x32xf32> to vector<16x4xf32>
    %cst_15 = arith.constant dense<0xFF800000> : vector<16xf32>
    %50 = vector.multi_reduction <maximumf>, %49, %cst_15 [1] : vector<16x4xf32> to vector<16xf32>
    %51 = vector.shape_cast %50 : vector<16xf32> to vector<16x1xf32>
    %52 = vector.broadcast %51 : vector<16x1xf32> to vector<16x4xf32>
    %53 = arith.subf %49, %52 : vector<16x4xf32>
    %54 = math.exp %53 : vector<16x4xf32>
    %cst_16 = arith.constant dense<0.000000e+00> : vector<16xf32>
    %55 = vector.multi_reduction <add>, %54, %cst_16 [1] : vector<16x4xf32> to vector<16xf32>
    %56 = vector.shape_cast %55 : vector<16xf32> to vector<16x1xf32>
    %57 = vector.broadcast %56 : vector<16x1xf32> to vector<16x4xf32>
    %58 = arith.divf %54, %57 : vector<16x4xf32>
    %59 = vector.extract_strided_slice %8 {offsets = [0, 20], sizes = [16, 4], strides = [1, 1]} : vector<16x32xf32> to vector<16x4xf32>
    %cst_17 = arith.constant dense<0xFF800000> : vector<16xf32>
    %60 = vector.multi_reduction <maximumf>, %59, %cst_17 [1] : vector<16x4xf32> to vector<16xf32>
    %61 = vector.shape_cast %60 : vector<16xf32> to vector<16x1xf32>
    %62 = vector.broadcast %61 : vector<16x1xf32> to vector<16x4xf32>
    %63 = arith.subf %59, %62 : vector<16x4xf32>
    %64 = math.exp %63 : vector<16x4xf32>
    %cst_18 = arith.constant dense<0.000000e+00> : vector<16xf32>
    %65 = vector.multi_reduction <add>, %64, %cst_18 [1] : vector<16x4xf32> to vector<16xf32>
    %66 = vector.shape_cast %65 : vector<16xf32> to vector<16x1xf32>
    %67 = vector.broadcast %66 : vector<16x1xf32> to vector<16x4xf32>
    %68 = arith.divf %64, %67 : vector<16x4xf32>
    %69 = vector.extract_strided_slice %8 {offsets = [0, 24], sizes = [16, 4], strides = [1, 1]} : vector<16x32xf32> to vector<16x4xf32>
    %cst_19 = arith.constant dense<0xFF800000> : vector<16xf32>
    %70 = vector.multi_reduction <maximumf>, %69, %cst_19 [1] : vector<16x4xf32> to vector<16xf32>
    %71 = vector.shape_cast %70 : vector<16xf32> to vector<16x1xf32>
    %72 = vector.broadcast %71 : vector<16x1xf32> to vector<16x4xf32>
    %73 = arith.subf %69, %72 : vector<16x4xf32>
    %74 = math.exp %73 : vector<16x4xf32>
    %cst_20 = arith.constant dense<0.000000e+00> : vector<16xf32>
    %75 = vector.multi_reduction <add>, %74, %cst_20 [1] : vector<16x4xf32> to vector<16xf32>
    %76 = vector.shape_cast %75 : vector<16xf32> to vector<16x1xf32>
    %77 = vector.broadcast %76 : vector<16x1xf32> to vector<16x4xf32>
    %78 = arith.divf %74, %77 : vector<16x4xf32>
    %79 = vector.extract_strided_slice %8 {offsets = [0, 28], sizes = [16, 4], strides = [1, 1]} : vector<16x32xf32> to vector<16x4xf32>
    %cst_21 = arith.constant dense<0xFF800000> : vector<16xf32>
    %80 = vector.multi_reduction <maximumf>, %79, %cst_21 [1] : vector<16x4xf32> to vector<16xf32>
    %81 = vector.shape_cast %80 : vector<16xf32> to vector<16x1xf32>
    %82 = vector.broadcast %81 : vector<16x1xf32> to vector<16x4xf32>
    %83 = arith.subf %79, %82 : vector<16x4xf32>
    %84 = math.exp %83 : vector<16x4xf32>
    %cst_22 = arith.constant dense<0.000000e+00> : vector<16xf32>
    %85 = vector.multi_reduction <add>, %84, %cst_22 [1] : vector<16x4xf32> to vector<16xf32>
    %86 = vector.shape_cast %85 : vector<16xf32> to vector<16x1xf32>
    %87 = vector.broadcast %86 : vector<16x1xf32> to vector<16x4xf32>
    %88 = arith.divf %84, %87 : vector<16x4xf32>
    %89 = tpu.concatenate %18, %28, %38, %48, %58, %68, %78, %88 in 1 : vector<16x4xf32>, vector<16x4xf32>, vector<16x4xf32>, vector<16x4xf32>, vector<16x4xf32>, vector<16x4xf32>, vector<16x4xf32>, vector<16x4xf32> -> vector<16x32xf32>
    %c0_23 = arith.constant 0 : index
    %c0_24 = arith.constant 0 : index
    %90 = vector.load %arg5[%c0_23, %c0_24] : memref<16x32xf32, #tpu.memory_space<vmem>>, vector<16x32xf32>
    tpu.vector_store %arg5[%c0_23, %c0_24], %89 {strides = array<i32>} : memref<16x32xf32, #tpu.memory_space<vmem>>, vector<16x32xf32>,
    return
  }
  func.func @transform_0(%arg0: i32) -> (i32, i32) {
    %c0_i32 = arith.constant 0 : i32
    %c0_i32_0 = arith.constant 0 : i32
    return %arg0, %c0_i32 : i32, i32
  }
  func.func @transform_1(%arg0: i32) -> (i32, i32) {
    %c0_i32 = arith.constant 0 : i32
    %c0_i32_0 = arith.constant 0 : i32
    %c0_i32_1 = arith.constant 0 : i32
    return %c0_i32, %c0_i32_0 : i32, i32
  }
  func.func @transform_2(%arg0: i32) -> (i32, i32) {
    %c0_i32 = arith.constant 0 : i32
    %c0_i32_0 = arith.constant 0 : i32
    %c0_i32_1 = arith.constant 0 : i32
    return %c0_i32, %c0_i32_0 : i32, i32
  }
  func.func @transform_3(%arg0: i32) -> (i32, i32) {
    %c0_i32 = arith.constant 0 : i32
    %c0_i32_0 = arith.constant 0 : i32
    return %arg0, %c0_i32 : i32, i32
  }
  func.func @transform_4(%arg0: i32) -> (i32, i32) {
    %c0_i32 = arith.constant 0 : i32
    %c0_i32_0 = arith.constant 0 : i32
    return %arg0, %c0_i32 : i32, i32
  }
}

</mosaic_0001>

<llo_original>
// kernel: tpu_custom_call.1
$region0: #{tpu_custom_call.1}
  #allocation0 [shape = 'u32[]', space=smem, size = 0x4, offset = 0x4, fixed_abs, tag = 'smem constant byte address 0x4 - core index']
  #allocation1 [shape = 'u32[72,128]{1,0:T(1,128)}', space=vmem, size = 0x9000, scoped, tag = 'internal scratch']
  %s0 = inlined_call_operand.hbm [shape: f32[16,32], index: 0, kind: input, shape index: {}]
  %s1 = inlined_call_operand.hbm [shape: f32[32,96], index: 1, kind: input, shape index: {}]
  %s2 = inlined_call_operand.vmem [shape: f32[1,96], index: 2, kind: input, shape index: {}]
  %s3 = inlined_call_operand.hbm [shape: f32[16,64], index: 3, kind: output, shape index: {0}]
  %s4 = inlined_call_operand.hbm [shape: f32[16,32], index: 4, kind: output, shape index: {1}]
  %5 = xla_tuple %s3, %s4
  %s6 = sld [smem:[#allocation0]]
  $region38: #{tpu_custom_call.1} parent=0
    _
  %s8 = ssub.s32 1, %s6
  %s9 = scalar_select 0, %s8, %s6
  $region1: #{tpu_custom_call.1} parent=0
    #allocation2 [shape = 'u8[8192]{0}', space=vmem, size = 0x2000, scoped, tag = 'input window, operand 0, single buffered']
    #allocation3 [shape = 's32[1]{0}', space=sflag, size = 0x4, scoped, tag = 'scoped memory for tpu_custom_call.1']
    #allocation4 [shape = 's32[1]{0}', space=sflag, size = 0x4, scoped, tag = 'scoped memory for tpu_custom_call.1']
    #allocation5 [shape = 'u8[16384]{0}', space=vmem, size = 0x4000, scoped, tag = 'input window, operand 1, single buffered']
    #allocation6 [shape = 's32[1]{0}', space=sflag, size = 0x4, scoped, tag = 'scoped memory for tpu_custom_call.1']
    #allocation7 [shape = 'u8[8192]{0}', space=vmem, size = 0x2000, scoped, tag = 'output window, operand 0, single buffered']
    #allocation8 [shape = 'u8[8192]{0}', space=vmem, size = 0x2000, scoped, tag = 'output window, operand 1, single buffered']
    #allocation9 [shape = 's32[1]{0}', space=sflag, size = 0x4, scoped, tag = 'scoped memory for tpu_custom_call.1']
    %10 = vsyncpa [#allocation3], 0
    %11 = vsyncpa [#allocation6], 0
    %12 = vsyncpa [#allocation4], 0
    %13 = vsyncpa [#allocation9], 0
    // Predicated region
    $region2: #{tpu_custom_call.1} parent=1 // pred_check
      _
    $region3: #{tpu_custom_call.1} parent=1 // pred_check_branch
      %15 = sbr.rel (0) target = $region5
    $region4: #{tpu_custom_call.1} parent=1 // pred_region
      %17 = vsyncadd [#allocation3], 0
      %s18 = sshll.u32 %s0, 4
      %s19 = int_to_ptr.hbm [resolvable:$true] %s18
      %s20 = sshll.u32 [#allocation2], 4
      %s21 = int_to_ptr.vmem [resolvable:$true] %s20
      %26 = dma.hbm_to_vmem [thread:$0]  %s19, 256, %s21, [#allocation3], 128, 128, 8
    $region5: #{tpu_custom_call.1} parent=1 // pred_fallthru
      _
    // Predicated region
    $region6: #{tpu_custom_call.1} parent=1 // pred_check
      _
    $region7: #{tpu_custom_call.1} parent=1 // pred_check_branch
      %28 = sbr.rel (0) target = $region9
    $region8: #{tpu_custom_call.1} parent=1 // pred_region
      %30 = vsyncadd [#allocation6], 0
      %s31 = sshll.u32 %s1, 4
      %s32 = int_to_ptr.hbm [resolvable:$true] %s31
      %s33 = sshll.u32 [#allocation5], 4
      %s34 = int_to_ptr.vmem [resolvable:$true] %s33
      %39 = dma.hbm_to_vmem [thread:$0]  %s32, 512, %s34, [#allocation6], 128, 128, 8
    $region9: #{tpu_custom_call.1} parent=1 // pred_fallthru
      _
    // Predicated region
    $region10: #{tpu_custom_call.1} parent=1 // pred_check
      _
    $region11: #{tpu_custom_call.1} parent=1 // pred_check_branch
      %41 = sbr.rel (0) target = $region13
    $region12: #{tpu_custom_call.1} parent=1 // pred_region
      _
    $region13: #{tpu_custom_call.1} parent=1 // pred_fallthru
      _
    // Predicated region
    $region14: #{tpu_custom_call.1} parent=1 // pred_check
      _
    $region15: #{tpu_custom_call.1} parent=1 // pred_check_branch
      %43 = sbr.rel (0) target = $region17
    $region16: #{tpu_custom_call.1} parent=1 // pred_region
      %45 = dma.done [#allocation3], 256
    $region17: #{tpu_custom_call.1} parent=1 // pred_fallthru
      _
    // Predicated region
    $region18: #{tpu_custom_call.1} parent=1 // pred_check
      _
    $region19: #{tpu_custom_call.1} parent=1 // pred_check_branch
      %47 = sbr.rel (0) target = $region21
    $region20: #{tpu_custom_call.1} parent=1 // pred_region
      %49 = dma.done [#allocation6], 512
    $region21: #{tpu_custom_call.1} parent=1 // pred_fallthru
      _
    %v50 = vld [vmem:[#allocation2] sm:$0xff]
    %v51 = vld [vmem:[#allocation2 + $0x8] sm:$0xff]
    %v52 = vld [vmem:[#allocation5] sm:$0xff]
    %v53 = vld [vmem:[#allocation5 + $0x8] sm:$0xff]
    %v54 = vld [vmem:[#allocation5 + $0x10] sm:$0xff]
    %v55 = vld [vmem:[#allocation5 + $0x18] sm:$0xff]
    %v56 = vld [vmem:[%s2] sm:$0x1]
    %v58 = vperm.slane %v56, 0
    %vm60 = vcmask 261120
    %v62 = vsel %vm60, %v50, 0
    %v65 = vsel %vm60, %v51, 0
    %67 = vmatpush.msra.mxu0 0.0
    %68 = vmatpush.msra.mxu0 0.0
    %69 = vmatpush.msra.mxu0 0.0
    %70 = vmatpush.msra.mxu0 0.0
    %71 = vmatpush.msra.mxu0 0.0
    %72 = vmatpush.msra.mxu0 0.0
    %73 = vmatpush.msra.mxu0 0.0
    %74 = vmatpush.msra.mxu0 0.0
    %75 = vmatpush.msra.mxu0 0.0
    %76 = vmatpush.msra.mxu0 0.0
    %77 = vmatpush.msra.mxu0 0.0
    %78 = vmatpush.msra.mxu0 0.0
    %79 = vmatpush.msra.mxu0 %v55
    %80 = vmatpush.msra.mxu0 %v54
    %81 = vmatpush.msra.mxu0 %v53
    %82 = vmatpush.msra.mxu0 %v52
    %83 = vmatmul.f32.gmra.mxu0 %v62
    %v84 = vpop.f32.mrf.mxu0
    %v85 = vadd.f32 %v58, %v84
    %86 = vmatmul.f32.gmra.mxu0 %v65
    %v87 = vpop.f32.mrf.mxu0
    %v88 = vadd.f32 %v58, %v87
    %89 = vdwg.mxu0
    %vm90 = vcmask 523264
    %91 = vst.msk [vmem:[#allocation7] sm:$0xff] %vm90, %v85
    %92 = vst.msk [vmem:[#allocation7 + $0x8] sm:$0xff] %vm90, %v88
    %vm93 = vcmask 556544
    %v94 = vsel %vm93, %v85, -inf
    %95 = vmax.xlane.f32.xlu0 %v94
    %v96 = vpop.xlane.xlu0 %95
    %v97 = vsel %vm93, %v88, -inf
    %98 = vmax.xlane.f32.xlu0 %v97
    %v99 = vpop.xlane.xlu0 %98
    %v100 = vsub.f32 %v85, %v96
    %v101 = vsub.f32 %v88, %v99
    %v102 = vmul.f32 %v100, 1.442695
    %v103 = vpow.pop %v102
    %v104 = vmul.f32 %v101, 1.442695
    %v105 = vpow.pop %v104
    %108 = vrot.lane.b32.xlu0 %v103, 64
    %v109 = vpop.permute.xlu0 %108
    %110 = vrot.lane.b32.xlu0 %v105, 64
    %v111 = vpop.permute.xlu0 %110
    %vm114 = vcmask 31744
    %v115 = vsel %vm114, %v109, 0.0
    %116 = vadd.xlane.f32.xlu0 %v115
    %v117 = vpop.xlane.xlu0 %116
    %v118 = vsel %vm114, %v111, 0.0
    %119 = vadd.xlane.f32.xlu0 %v118
    %v120 = vpop.xlane.xlu0 %119
    %v121 = vrcp.pop %v117
    %v122 = vmul.f32 %v117, %v121
    %v123 = vsub.f32 1.0, %v122
    %v124 = vmul.f32 %v121, %v123
    %v125 = vadd.f32 %v121, %v124
    %vm126 = vweird.f32 %v117
    %vm127 = vweird.f32 %v121
    %vm128 = vmor %vm126, %vm127
    %v129 = vsel %vm128, %v121, %v125
    %v130 = vand.u32 2147483647, %v117
    %vm131 = vcmp.eq.f32.partialorder %v130, 8.507059e+37
    %v132 = vand.u32 %v117, 2147483648
    %v133 = vor.u32 1.1754944e-38, %v132
    %v134 = vsel %vm131, %v133, %v129
    %v135 = vmul.f32 %v103, %v134
    %v136 = vrcp.pop %v120
    %v137 = vmul.f32 %v120, %v136
    %v138 = vsub.f32 1.0, %v137
    %v139 = vmul.f32 %v136, %v138
    %v140 = vadd.f32 %v136, %v139
    %vm141 = vweird.f32 %v120
    %vm142 = vweird.f32 %v136
    %vm143 = vmor %vm141, %vm142
    %v144 = vsel %vm143, %v136, %v140
    %v145 = vand.u32 2147483647, %v120
    %vm146 = vcmp.eq.f32.partialorder %v145, 8.507059e+37
    %v147 = vand.u32 %v120, 2147483648
    %v148 = vor.u32 1.1754944e-38, %v147
    %v149 = vsel %vm146, %v148, %v144
    %v150 = vmul.f32 %v105, %v149
    %vm151 = vcmask 589344
    %v152 = vsel %vm151, %v85, -inf
    %153 = vmax.xlane.f32.xlu0 %v152
    %v154 = vpop.xlane.xlu0 %153
    %v155 = vsel %vm151, %v88, -inf
    %156 = vmax.xlane.f32.xlu0 %v155
    %v157 = vpop.xlane.xlu0 %156
    %v158 = vsub.f32 %v85, %v154
    %v159 = vsub.f32 %v88, %v157
    %v160 = vmul.f32 %v158, 1.442695
    %v161 = vpow.pop %v160
    %v162 = vmul.f32 %v159, 1.442695
    %v163 = vpow.pop %v162
    %166 = vrot.lane.b32.xlu0 %v161, 60
    %v167 = vpop.permute.xlu0 %166
    %168 = vrot.lane.b32.xlu0 %v163, 60
    %v169 = vpop.permute.xlu0 %168
    %v172 = vsel %vm114, %v167, 0.0
    %173 = vadd.xlane.f32.xlu0 %v172
    %v174 = vpop.xlane.xlu0 %173
    %v175 = vsel %vm114, %v169, 0.0
    %176 = vadd.xlane.f32.xlu0 %v175
    %v177 = vpop.xlane.xlu0 %176
    %v178 = vrcp.pop %v174
    %v179 = vmul.f32 %v174, %v178
    %v180 = vsub.f32 1.0, %v179
    %v181 = vmul.f32 %v178, %v180
    %v182 = vadd.f32 %v178, %v181
    %vm183 = vweird.f32 %v174
    %vm184 = vweird.f32 %v178
    %vm185 = vmor %vm183, %vm184
    %v186 = vsel %vm185, %v178, %v182
    %v187 = vand.u32 2147483647, %v174
    %vm188 = vcmp.eq.f32.partialorder %v187, 8.507059e+37
    %v189 = vand.u32 %v174, 2147483648
    %v190 = vor.u32 1.1754944e-38, %v189
    %v191 = vsel %vm188, %v190, %v186
    %v192 = vmul.f32 %v161, %v191
    %v193 = vrcp.pop %v177
    %v194 = vmul.f32 %v177, %v193
    %v195 = vsub.f32 1.0, %v194
    %v196 = vmul.f32 %v193, %v195
    %v197 = vadd.f32 %v193, %v196
    %vm198 = vweird.f32 %v177
    %vm199 = vweird.f32 %v193
    %vm200 = vmor %vm198, %vm199
    %v201 = vsel %vm200, %v193, %v197
    %v202 = vand.u32 2147483647, %v177
    %vm203 = vcmp.eq.f32.partialorder %v202, 8.507059e+37
    %v204 = vand.u32 %v177, 2147483648
    %v205 = vor.u32 1.1754944e-38, %v204
    %v206 = vsel %vm203, %v205, %v201
    %v207 = vmul.f32 %v163, %v206
    %vm208 = vcmask 622144
    %v209 = vsel %vm208, %v85, -inf
    %210 = vmax.xlane.f32.xlu0 %v209
    %v211 = vpop.xlane.xlu0 %210
    %v212 = vsel %vm208, %v88, -inf
    %213 = vmax.xlane.f32.xlu0 %v212
    %v214 = vpop.xlane.xlu0 %213
    %v215 = vsub.f32 %v85, %v211
    %v216 = vsub.f32 %v88, %v214
    %v217 = vmul.f32 %v215, 1.442695
    %v218 = vpow.pop %v217
    %v219 = vmul.f32 %v216, 1.442695
    %v220 = vpow.pop %v219
    %223 = vrot.lane.b32.xlu0 %v218, 56
    %v224 = vpop.permute.xlu0 %223
    %225 = vrot.lane.b32.xlu0 %v220, 56
    %v226 = vpop.permute.xlu0 %225
    %v229 = vsel %vm114, %v224, 0.0
    %230 = vadd.xlane.f32.xlu0 %v229
    %v231 = vpop.xlane.xlu0 %230
    %v232 = vsel %vm114, %v226, 0.0
    %233 = vadd.xlane.f32.xlu0 %v232
    %v234 = vpop.xlane.xlu0 %233
    %v235 = vrcp.pop %v231
    %v236 = vmul.f32 %v231, %v235
    %v237 = vsub.f32 1.0, %v236
    %v238 = vmul.f32 %v235, %v237
    %v239 = vadd.f32 %v235, %v238
    %vm240 = vweird.f32 %v231
    %vm241 = vweird.f32 %v235
    %vm242 = vmor %vm240, %vm241
    %v243 = vsel %vm242, %v235, %v239
    %v244 = vand.u32 2147483647, %v231
    %vm245 = vcmp.eq.f32.partialorder %v244, 8.507059e+37
    %v246 = vand.u32 %v231, 2147483648
    %v247 = vor.u32 1.1754944e-38, %v246
    %v248 = vsel %vm245, %v247, %v243
    %v249 = vmul.f32 %v218, %v248
    %v250 = vrcp.pop %v234
    %v251 = vmul.f32 %v234, %v250
    %v252 = vsub.f32 1.0, %v251
    %v253 = vmul.f32 %v250, %v252
    %v254 = vadd.f32 %v250, %v253
    %vm255 = vweird.f32 %v234
    %vm256 = vweird.f32 %v250
    %vm257 = vmor %vm255, %vm256
    %v258 = vsel %vm257, %v250, %v254
    %v259 = vand.u32 2147483647, %v234
    %vm260 = vcmp.eq.f32.partialorder %v259, 8.507059e+37
    %v261 = vand.u32 %v234, 2147483648
    %v262 = vor.u32 1.1754944e-38, %v261
    %v263 = vsel %vm260, %v262, %v258
    %v264 = vmul.f32 %v220, %v263
    %vm265 = vcmask 654944
    %v266 = vsel %vm265, %v85, -inf
    %267 = vmax.xlane.f32.xlu0 %v266
    %v268 = vpop.xlane.xlu0 %267
    %v269 = vsel %vm265, %v88, -inf
    %270 = vmax.xlane.f32.xlu0 %v269
    %v271 = vpop.xlane.xlu0 %270
    %v272 = vsub.f32 %v85, %v268
    %v273 = vsub.f32 %v88, %v271
    %v274 = vmul.f32 %v272, 1.442695
    %v275 = vpow.pop %v274
    %v276 = vmul.f32 %v273, 1.442695
    %v277 = vpow.pop %v276
    %280 = vrot.lane.b32.xlu0 %v275, 52
    %v281 = vpop.permute.xlu0 %280
    %282 = vrot.lane.b32.xlu0 %v277, 52
    %v283 = vpop.permute.xlu0 %282
    %v286 = vsel %vm114, %v281, 0.0
    %287 = vadd.xlane.f32.xlu0 %v286
    %v288 = vpop.xlane.xlu0 %287
    %v289 = vsel %vm114, %v283, 0.0
    %290 = vadd.xlane.f32.xlu0 %v289
    %v291 = vpop.xlane.xlu0 %290
    %v292 = vrcp.pop %v288
    %v293 = vmul.f32 %v288, %v292
    %v294 = vsub.f32 1.0, %v293
    %v295 = vmul.f32 %v292, %v294
    %v296 = vadd.f32 %v292, %v295
    %vm297 = vweird.f32 %v288
    %vm298 = vweird.f32 %v292
    %vm299 = vmor %vm297, %vm298
    %v300 = vsel %vm299, %v292, %v296
    %v301 = vand.u32 2147483647, %v288
    %vm302 = vcmp.eq.f32.partialorder %v301, 8.507059e+37
    %v303 = vand.u32 %v288, 2147483648
    %v304 = vor.u32 1.1754944e-38, %v303
    %v305 = vsel %vm302, %v304, %v300
    %v306 = vmul.f32 %v275, %v305
    %v307 = vrcp.pop %v291
    %v308 = vmul.f32 %v291, %v307
    %v309 = vsub.f32 1.0, %v308
    %v310 = vmul.f32 %v307, %v309
    %v311 = vadd.f32 %v307, %v310
    %vm312 = vweird.f32 %v291
    %vm313 = vweird.f32 %v307
    %vm314 = vmor %vm312, %vm313
    %v315 = vsel %vm314, %v307, %v311
    %v316 = vand.u32 2147483647, %v291
    %vm317 = vcmp.eq.f32.partialorder %v316, 8.507059e+37
    %v318 = vand.u32 %v291, 2147483648
    %v319 = vor.u32 1.1754944e-38, %v318
    %v320 = vsel %vm317, %v319, %v315
    %v321 = vmul.f32 %v277, %v320
    %vm322 = vcmask 687744
    %v323 = vsel %vm322, %v85, -inf
    %324 = vmax.xlane.f32.xlu0 %v323
    %v325 = vpop.xlane.xlu0 %324
    %v326 = vsel %vm322, %v88, -inf
    %327 = vmax.xlane.f32.xlu0 %v326
    %v328 = vpop.xlane.xlu0 %327
    %v329 = vsub.f32 %v85, %v325
    %v330 = vsub.f32 %v88, %v328
    %v331 = vmul.f32 %v329, 1.442695
    %v332 = vpow.pop %v331
    %v333 = vmul.f32 %v330, 1.442695
    %v334 = vpow.pop %v333
    %337 = vrot.lane.b32.xlu0 %v332, 48
    %v338 = vpop.permute.xlu0 %337
    %339 = vrot.lane.b32.xlu0 %v334, 48
    %v340 = vpop.permute.xlu0 %339
    %v343 = vsel %vm114, %v338, 0.0
    %344 = vadd.xlane.f32.xlu0 %v343
    %v345 = vpop.xlane.xlu0 %344
    %v346 = vsel %vm114, %v340, 0.0
    %347 = vadd.xlane.f32.xlu0 %v346
    %v348 = vpop.xlane.xlu0 %347
    %v349 = vrcp.pop %v345
    %v350 = vmul.f32 %v345, %v349
    %v351 = vsub.f32 1.0, %v350
    %v352 = vmul.f32 %v349, %v351
    %v353 = vadd.f32 %v349, %v352
    %vm354 = vweird.f32 %v345
    %vm355 = vweird.f32 %v349
    %vm356 = vmor %vm354, %vm355
    %v357 = vsel %vm356, %v349, %v353
    %v358 = vand.u32 2147483647, %v345
    %vm359 = vcmp.eq.f32.partialorder %v358, 8.507059e+37
    %v360 = vand.u32 %v345, 2147483648
    %v361 = vor.u32 1.1754944e-38, %v360
    %v362 = vsel %vm359, %v361, %v357
    %v363 = vmul.f32 %v332, %v362
    %v364 = vrcp.pop %v348
    %v365 = vmul.f32 %v348, %v364
    %v366 = vsub.f32 1.0, %v365
    %v367 = vmul.f32 %v364, %v366
    %v368 = vadd.f32 %v364, %v367
    %vm369 = vweird.f32 %v348
    %vm370 = vweird.f32 %v364
    %vm371 = vmor %vm369, %vm370
    %v372 = vsel %vm371, %v364, %v368
    %v373 = vand.u32 2147483647, %v348
    %vm374 = vcmp.eq.f32.partialorder %v373, 8.507059e+37
    %v375 = vand.u32 %v348, 2147483648
    %v376 = vor.u32 1.1754944e-38, %v375
    %v377 = vsel %vm374, %v376, %v372
    %v378 = vmul.f32 %v334, %v377
    %vm379 = vcmask 720544
    %v380 = vsel %vm379, %v85, -inf
    %381 = vmax.xlane.f32.xlu0 %v380
    %v382 = vpop.xlane.xlu0 %381
    %v383 = vsel %vm379, %v88, -inf
    %384 = vmax.xlane.f32.xlu0 %v383
    %v385 = vpop.xlane.xlu0 %384
    %v386 = vsub.f32 %v85, %v382
    %v387 = vsub.f32 %v88, %v385
    %v388 = vmul.f32 %v386, 1.442695
    %v389 = vpow.pop %v388
    %v390 = vmul.f32 %v387, 1.442695
    %v391 = vpow.pop %v390
    %394 = vrot.lane.b32.xlu0 %v389, 44
    %v395 = vpop.permute.xlu0 %394
    %396 = vrot.lane.b32.xlu0 %v391, 44
    %v397 = vpop.permute.xlu0 %396
    %v400 = vsel %vm114, %v395, 0.0
    %401 = vadd.xlane.f32.xlu0 %v400
    %v402 = vpop.xlane.xlu0 %401
    %v403 = vsel %vm114, %v397, 0.0
    %404 = vadd.xlane.f32.xlu0 %v403
    %v405 = vpop.xlane.xlu0 %404
    %v406 = vrcp.pop %v402
    %v407 = vmul.f32 %v402, %v406
    %v408 = vsub.f32 1.0, %v407
    %v409 = vmul.f32 %v406, %v408
    %v410 = vadd.f32 %v406, %v409
    %vm411 = vweird.f32 %v402
    %vm412 = vweird.f32 %v406
    %vm413 = vmor %vm411, %vm412
    %v414 = vsel %vm413, %v406, %v410
    %v415 = vand.u32 2147483647, %v402
    %vm416 = vcmp.eq.f32.partialorder %v415, 8.507059e+37
    %v417 = vand.u32 %v402, 2147483648
    %v418 = vor.u32 1.1754944e-38, %v417
    %v419 = vsel %vm416, %v418, %v414
    %v420 = vmul.f32 %v389, %v419
    %v421 = vrcp.pop %v405
    %v422 = vmul.f32 %v405, %v421
    %v423 = vsub.f32 1.0, %v422
    %v424 = vmul.f32 %v421, %v423
    %v425 = vadd.f32 %v421, %v424
    %vm426 = vweird.f32 %v405
    %vm427 = vweird.f32 %v421
    %vm428 = vmor %vm426, %vm427
    %v429 = vsel %vm428, %v421, %v425
    %v430 = vand.u32 2147483647, %v405
    %vm431 = vcmp.eq.f32.partialorder %v430, 8.507059e+37
    %v432 = vand.u32 %v405, 2147483648
    %v433 = vor.u32 1.1754944e-38, %v432
    %v434 = vsel %vm431, %v433, %v429
    %v435 = vmul.f32 %v391, %v434
    %vm436 = vcmask 753344
    %v437 = vsel %vm436, %v85, -inf
    %438 = vmax.xlane.f32.xlu0 %v437
    %v439 = vpop.xlane.xlu0 %438
    %v440 = vsel %vm436, %v88, -inf
    %441 = vmax.xlane.f32.xlu0 %v440
    %v442 = vpop.xlane.xlu0 %441
    %v443 = vsub.f32 %v85, %v439
    %v444 = vsub.f32 %v88, %v442
    %v445 = vmul.f32 %v443, 1.442695
    %v446 = vpow.pop %v445
    %v447 = vmul.f32 %v444, 1.442695
    %v448 = vpow.pop %v447
    %451 = vrot.lane.b32.xlu0 %v446, 40
    %v452 = vpop.permute.xlu0 %451
    %453 = vrot.lane.b32.xlu0 %v448, 40
    %v454 = vpop.permute.xlu0 %453
    %v457 = vsel %vm114, %v452, 0.0
    %458 = vadd.xlane.f32.xlu0 %v457
    %v459 = vpop.xlane.xlu0 %458
    %v460 = vsel %vm114, %v454, 0.0
    %461 = vadd.xlane.f32.xlu0 %v460
    %v462 = vpop.xlane.xlu0 %461
    %v463 = vrcp.pop %v459
    %v464 = vmul.f32 %v459, %v463
    %v465 = vsub.f32 1.0, %v464
    %v466 = vmul.f32 %v463, %v465
    %v467 = vadd.f32 %v463, %v466
    %vm468 = vweird.f32 %v459
    %vm469 = vweird.f32 %v463
    %vm470 = vmor %vm468, %vm469
    %v471 = vsel %vm470, %v463, %v467
    %v472 = vand.u32 2147483647, %v459
    %vm473 = vcmp.eq.f32.partialorder %v472, 8.507059e+37
    %v474 = vand.u32 %v459, 2147483648
    %v475 = vor.u32 1.1754944e-38, %v474
    %v476 = vsel %vm473, %v475, %v471
    %v477 = vmul.f32 %v446, %v476
    %v478 = vrcp.pop %v462
    %v479 = vmul.f32 %v462, %v478
    %v480 = vsub.f32 1.0, %v479
    %v481 = vmul.f32 %v478, %v480
    %v482 = vadd.f32 %v478, %v481
    %vm483 = vweird.f32 %v462
    %vm484 = vweird.f32 %v478
    %vm485 = vmor %vm483, %vm484
    %v486 = vsel %vm485, %v478, %v482
    %v487 = vand.u32 2147483647, %v462
    %vm488 = vcmp.eq.f32.partialorder %v487, 8.507059e+37
    %v489 = vand.u32 %v462, 2147483648
    %v490 = vor.u32 1.1754944e-38, %v489
    %v491 = vsel %vm488, %v490, %v486
    %v492 = vmul.f32 %v448, %v491
    %vm493 = vcmask 786144
    %v494 = vsel %vm493, %v85, -inf
    %495 = vmax.xlane.f32.xlu0 %v494
    %v496 = vpop.xlane.xlu0 %495
    %v497 = vsel %vm493, %v88, -inf
    %498 = vmax.xlane.f32.xlu0 %v497
    %v499 = vpop.xlane.xlu0 %498
    %v500 = vsub.f32 %v85, %v496
    %v501 = vsub.f32 %v88, %v499
    %v502 = vmul.f32 %v500, 1.442695
    %v503 = vpow.pop %v502
    %v504 = vmul.f32 %v501, 1.442695
    %v505 = vpow.pop %v504
    %508 = vrot.lane.b32.xlu0 %v503, 36
    %v509 = vpop.permute.xlu0 %508
    %510 = vrot.lane.b32.xlu0 %v505, 36
    %v511 = vpop.permute.xlu0 %510
    %v514 = vsel %vm114, %v509, 0.0
    %515 = vadd.xlane.f32.xlu0 %v514
    %v516 = vpop.xlane.xlu0 %515
    %v517 = vsel %vm114, %v511, 0.0
    %518 = vadd.xlane.f32.xlu0 %v517
    %v519 = vpop.xlane.xlu0 %518
    %v520 = vrcp.pop %v516
    %v521 = vmul.f32 %v516, %v520
    %v522 = vsub.f32 1.0, %v521
    %v523 = vmul.f32 %v520, %v522
    %v524 = vadd.f32 %v520, %v523
    %vm525 = vweird.f32 %v516
    %vm526 = vweird.f32 %v520
    %vm527 = vmor %vm525, %vm526
    %v528 = vsel %vm527, %v520, %v524
    %v529 = vand.u32 2147483647, %v516
    %vm530 = vcmp.eq.f32.partialorder %v529, 8.507059e+37
    %v531 = vand.u32 %v516, 2147483648
    %v532 = vor.u32 1.1754944e-38, %v531
    %v533 = vsel %vm530, %v532, %v528
    %v534 = vmul.f32 %v503, %v533
    %v535 = vrcp.pop %v519
    %v536 = vmul.f32 %v519, %v535
    %v537 = vsub.f32 1.0, %v536
    %v538 = vmul.f32 %v535, %v537
    %v539 = vadd.f32 %v535, %v538
    %vm540 = vweird.f32 %v519
    %vm541 = vweird.f32 %v535
    %vm542 = vmor %vm540, %vm541
    %v543 = vsel %vm542, %v535, %v539
    %v544 = vand.u32 2147483647, %v519
    %vm545 = vcmp.eq.f32.partialorder %v544, 8.507059e+37
    %v546 = vand.u32 %v519, 2147483648
    %v547 = vor.u32 1.1754944e-38, %v546
    %v548 = vsel %vm545, %v547, %v543
    %v549 = vmul.f32 %v505, %v548
    %552 = vrot.lane.b32.xlu0 %v135, 64
    %v553 = vpop.permute.xlu0 %552
    %554 = vrot.lane.b32.xlu0 %v150, 64
    %v555 = vpop.permute.xlu0 %554
    %560 = vrot.lane.b32.xlu0 %v192, 64
    %v561 = vpop.permute.xlu0 %560
    %562 = vrot.lane.b32.xlu0 %v207, 64
    %v563 = vpop.permute.xlu0 %562
    %568 = vrot.lane.b32.xlu0 %v249, 64
    %v569 = vpop.permute.xlu0 %568
    %570 = vrot.lane.b32.xlu0 %v264, 64
    %v571 = vpop.permute.xlu0 %570
    %576 = vrot.lane.b32.xlu0 %v306, 64
    %v577 = vpop.permute.xlu0 %576
    %578 = vrot.lane.b32.xlu0 %v321, 64
    %v579 = vpop.permute.xlu0 %578
    %584 = vrot.lane.b32.xlu0 %v363, 64
    %v585 = vpop.permute.xlu0 %584
    %586 = vrot.lane.b32.xlu0 %v378, 64
    %v587 = vpop.permute.xlu0 %586
    %592 = vrot.lane.b32.xlu0 %v420, 64
    %v593 = vpop.permute.xlu0 %592
    %594 = vrot.lane.b32.xlu0 %v435, 64
    %v595 = vpop.permute.xlu0 %594
    %600 = vrot.lane.b32.xlu0 %v477, 64
    %v601 = vpop.permute.xlu0 %600
    %602 = vrot.lane.b32.xlu0 %v492, 64
    %v603 = vpop.permute.xlu0 %602
    %608 = vrot.lane.b32.xlu0 %v534, 64
    %v609 = vpop.permute.xlu0 %608
    %610 = vrot.lane.b32.xlu0 %v549, 64
    %v611 = vpop.permute.xlu0 %610
    %v614 = vsel %vm114, %v553, %v561
    %v615 = vsel %vm114, %v555, %v563
    %vm616 = vcmask 64512
    %v617 = vsel %vm616, %v614, %v569
    %v618 = vsel %vm616, %v615, %v571
    %vm619 = vcmask 97280
    %v620 = vsel %vm619, %v617, %v577
    %v621 = vsel %vm619, %v618, %v579
    %vm622 = vcmask 130048
    %v623 = vsel %vm622, %v620, %v585
    %v624 = vsel %vm622, %v621, %v587
    %vm625 = vcmask 162816
    %v626 = vsel %vm625, %v623, %v593
    %v627 = vsel %vm625, %v624, %v595
    %vm628 = vcmask 195584
    %v629 = vsel %vm628, %v626, %v601
    %v630 = vsel %vm628, %v627, %v603
    %vm631 = vcmask 228352
    %v632 = vsel %vm631, %v629, %v609
    %v633 = vsel %vm631, %v630, %v611
    %634 = vst.msk [vmem:[#allocation8] sm:$0xff] %vm60, %v632
    %635 = vst.msk [vmem:[#allocation8 + $0x8] sm:$0xff] %vm60, %v633
    // Predicated region
    $region22: #{tpu_custom_call.1} parent=1 // pred_check
      _
    $region23: #{tpu_custom_call.1} parent=1 // pred_check_branch
      %637 = sbr.rel (0) target = $region25
    $region24: #{tpu_custom_call.1} parent=1 // pred_region
      %639 = vsyncadd [#allocation4], 0
      %s640 = sshll.u32 [#allocation7], 4
      %s641 = int_to_ptr.vmem [resolvable:$true] %s640
      %s642 = sshll.u32 %s3, 4
      %s643 = int_to_ptr.hbm [resolvable:$true] %s642
      %648 = dma.vmem_to_hbm [thread:$0]  %s641, 256, %s643, [#allocation4], 128, 128, 8
    $region25: #{tpu_custom_call.1} parent=1 // pred_fallthru
      _
    // Predicated region
    $region26: #{tpu_custom_call.1} parent=1 // pred_check
      _
    $region27: #{tpu_custom_call.1} parent=1 // pred_check_branch
      %650 = sbr.rel (0) target = $region29
    $region28: #{tpu_custom_call.1} parent=1 // pred_region
      %652 = vsyncadd [#allocation9], 0
      %s653 = sshll.u32 [#allocation8], 4
      %s654 = int_to_ptr.vmem [resolvable:$true] %s653
      %s655 = sshll.u32 %s4, 4
      %s656 = int_to_ptr.hbm [resolvable:$true] %s655
      %661 = dma.vmem_to_hbm [thread:$0]  %s654, 256, %s656, [#allocation9], 128, 128, 8
    $region29: #{tpu_custom_call.1} parent=1 // pred_fallthru
      _
    // Predicated region
    $region30: #{tpu_custom_call.1} parent=1 // pred_check
      _
    $region31: #{tpu_custom_call.1} parent=1 // pred_check_branch
      %663 = sbr.rel (0) target = $region33
    $region32: #{tpu_custom_call.1} parent=1 // pred_region
      %665 = dma.done [#allocation4], 256
    $region33: #{tpu_custom_call.1} parent=1 // pred_fallthru
      _
    // Predicated region
    $region34: #{tpu_custom_call.1} parent=1 // pred_check
      _
    $region35: #{tpu_custom_call.1} parent=1 // pred_check_branch
      %667 = sbr.rel (0) target = $region37
    $region36: #{tpu_custom_call.1} parent=1 // pred_region
      %669 = dma.done [#allocation9], 256
    $region37: #{tpu_custom_call.1} parent=1 // pred_fallthru
      _
    %670 = vsyncpa [#allocation3], 1
    %671 = vsyncpa [#allocation6], 1
    %672 = vsyncpa [#allocation4], 1
    %673 = vsyncpa [#allocation9], 1

</llo_original>
